<compile_context>
chip_gen: v7x
topology: tpu7x:2x2x1
jax: 0.10.0
libtpu: 0.0.40
codegen_flags: <defaults>
</compile_context>

<pallas_src>
import jax
import jax.numpy as jnp
from jax.experimental import pallas as pl
from jax.experimental.pallas import tpu as pltpu


def dmm_kernel(x_ref, w1_ref, b1_ref, w2_ref, b2_ref, out_ref):
    # One grid step == one sequence. Everything fits easily in VMEM.
    x = x_ref[0]                                   # (S, D), bf16 MXU operand

    # layer1: Linear(input_dim -> hidden_dim) + ReLU   (MXU bf16, f32 acc; VPU f32)
    h = jnp.dot(x, w1_ref[...], preferred_element_type=jnp.float32) + b1_ref[...]
    h = jnp.maximum(h, 0.0)

    # hidden2tag: Linear(hidden_dim -> tag_size_padded)  (MXU bf16, f32 acc)
    t = jnp.dot(h.astype(w2_ref.dtype), w2_ref[...],
                preferred_element_type=jnp.float32) + b2_ref[...]

    # log_softmax over dim=0 (sequence axis) — full S is resident in this
    # block, so a single max-subtracted pass is exact. All math in f32.
    m = jnp.max(t, axis=0, keepdims=True)
    z = t - m
    lse = jnp.log(jnp.sum(jnp.exp(z), axis=0, keepdims=True))
    out_ref[0] = (z - lse).astype(out_ref.dtype)   # lane-dense (S, T_pad) store


def deep_markov_forward(context, w1, b1, w2, b2, *, matmul_dtype=jnp.bfloat16):
    """context: (B, S, input_dim) or (S, input_dim); w1: (input_dim, H);
    b1: (1, H); w2: (H, T); b2: (1, T)  ->  (B, S, T) (or (S, T)),
    log-softmax'ed over the sequence axis of each sequence."""
    squeeze = context.ndim == 2
    if squeeze:
        context = context[None]
    B, S, D = context.shape
    H = w1.shape[1]
    T = w2.shape[1]
    T_pad = max(128, ((T + 127) // 128) * 128)     # lane-dense tag dimension

    # MXU operands in bf16; biases / elementwise / softmax stay f32.
    xq = context.astype(matmul_dtype)
    w1q = w1.astype(matmul_dtype)
    w2q = jnp.pad(w2.astype(matmul_dtype), ((0, 0), (0, T_pad - T)))
    b1f = b1.astype(jnp.float32).reshape(1, H)
    b2f = jnp.pad(b2.astype(jnp.float32).reshape(1, T), ((0, 0), (0, T_pad - T)))

    item = jnp.dtype(matmul_dtype).itemsize
    cost = pl.CostEstimate(
        flops=2 * B * S * (D * H + H * T_pad),
        transcendentals=B * S * T_pad,                       # exp in the softmax
        bytes_accessed=(B * S * D * item + D * H * item + H * T_pad * item
                        + H * 4 + T_pad * 4 + B * S * T_pad * 4),
    )

    out = pl.pallas_call(
        dmm_kernel,
        out_shape=jax.ShapeDtypeStruct((B, S, T_pad), jnp.float32),
        grid=(B,),
        in_specs=[
            pl.BlockSpec((1, S, D), lambda b: (b, 0, 0)),     # per-sequence slab
            pl.BlockSpec((D, H), lambda b: (0, 0)),           # resident weights
            pl.BlockSpec((1, H), lambda b: (0, 0)),
            pl.BlockSpec((H, T_pad), lambda b: (0, 0)),       # lane-dense weights
            pl.BlockSpec((1, T_pad), lambda b: (0, 0)),
        ],
        out_specs=pl.BlockSpec((1, S, T_pad), lambda b: (b, 0, 0)),
        compiler_params=pltpu.CompilerParams(
            dimension_semantics=("parallel",),                # 2x on v7x megacore
        ),
        cost_estimate=cost,
    )(xq, w1q, b1f, w2q, b2f)

    out = out[:, :, :T]                                       # drop padded tags
    return out[0] if squeeze else out


def reference_forward(context, w1, b1, w2, b2, matmul_dtype=jnp.bfloat16):
    # Mirrors the kernel's bf16-operand / f32-accumulate quantization.
    x = context.astype(matmul_dtype)
    h = jnp.dot(x, w1.astype(matmul_dtype),
                preferred_element_type=jnp.float32) + b1.astype(jnp.float32)
    h = jnp.maximum(h, 0.0)
    t = jnp.dot(h.astype(matmul_dtype), w2.astype(matmul_dtype),
                preferred_element_type=jnp.float32) + b2.astype(jnp.float32)
    return jax.nn.log_softmax(t, axis=0)


if __name__ == "__main__":
    # Small, forward-consistent shapes:
    #   embedding_dim = 31 -> input_dim = 32, hidden_dim = 32, tag_size = 16
    batch = 8           # B independent sequences in one pallas_call
    seq_len = 8
    embedding_dim = 31
    input_dim = embedding_dim + 1
    hidden_dim = 32
    tag_size = 16

    key = jax.random.PRNGKey(0)
    kx, kw1, kb1, kw2, kb2 = jax.random.split(key, 5)

    # Deterministic synthetic parameters (nn.Linear-shaped, stored transposed).
    context = jax.random.normal(kx, (batch, seq_len, input_dim), dtype=jnp.float32)
    w1 = jax.random.normal(kw1, (input_dim, hidden_dim), dtype=jnp.float32) * 0.1
    b1 = jax.random.normal(kb1, (1, hidden_dim), dtype=jnp.float32) * 0.1
    w2 = jax.random.normal(kw2, (hidden_dim, tag_size), dtype=jnp.float32) * 0.1
    b2 = jax.random.normal(kb2, (1, tag_size), dtype=jnp.float32) * 0.1

    out = deep_markov_forward(context, w1, b1, w2, b2)
    out = jax.block_until_ready(out)

    ref = jax.vmap(reference_forward, in_axes=(0, None, None, None, None))(
        context, w1, b1, w2, b2)
    assert out.shape == (batch, seq_len, tag_size)
    assert jnp.allclose(out, ref, atol=5e-5, rtol=1e-4), "mismatch vs reference"

    # Single-sequence path (matches the original module's forward signature).
    out1 = jax.block_until_ready(deep_markov_forward(context[0], w1, b1, w2, b2))
    assert out1.shape == (seq_len, tag_size)
    assert jnp.allclose(out1, ref[0], atol=5e-5, rtol=1e-4), "mismatch (single seq)"

    print("KERNEL_OK")
</pallas_src>

<mosaic_0001>
module attributes {stable_mosaic.version = 11 : i64} {
  func.func @dmm_kernel(%arg0: i32, %arg1: memref<1x8x32xbf16, #tpu.memory_space<vmem>>, %arg2: memref<32x32xbf16, #tpu.memory_space<vmem>>, %arg3: memref<1x32xf32, #tpu.memory_space<vmem>>, %arg4: memref<32x128xbf16, #tpu.memory_space<vmem>>, %arg5: memref<1x128xf32, #tpu.memory_space<vmem>>, %arg6: memref<1x8x128xf32, #tpu.memory_space<vmem>>) attributes {dimension_semantics = [#tpu.dimension_semantics<parallel>], iteration_bounds = array<i64: 8>, scalar_prefetch = 0 : i64, scratch_operands = 0 : i64, tpu.core_type = #tpu.core_type<tc>, window_params = [{transform_indices = @transform_0, window_bounds = array<i64: 1, 8, 32>}, {pipeline_mode = #tpu.pipeline_mode<synchronous>, transform_indices = @transform_1, window_bounds = array<i64: 32, 32>}, {pipeline_mode = #tpu.pipeline_mode<synchronous>, transform_indices = @transform_2, window_bounds = array<i64: 1, 32>}, {pipeline_mode = #tpu.pipeline_mode<synchronous>, transform_indices = @transform_3, window_bounds = array<i64: 32, 128>}, {pipeline_mode = #tpu.pipeline_mode<synchronous>, transform_indices = @transform_4, window_bounds = array<i64: 1, 128>}, {transform_indices = @transform_5, window_bounds = array<i64: 1, 8, 128>}]} {
    %c0 = arith.constant 0 : index
    %c0_0 = arith.constant 0 : index
    %c0_1 = arith.constant 0 : index
    %0 = vector.load %arg1[%c0, %c0_0, %c0_1] : memref<1x8x32xbf16, #tpu.memory_space<vmem>>, vector<1x8x32xbf16>
    %1 = vector.shape_cast %0 : vector<1x8x32xbf16> to vector<8x32xbf16>
    %c0_2 = arith.constant 0 : index
    %c0_3 = arith.constant 0 : index
    %2 = vector.load %arg2[%c0_2, %c0_3] : memref<32x32xbf16, #tpu.memory_space<vmem>>, vector<32x32xbf16>
    %cst = arith.constant dense<0.000000e+00> : vector<8x32xf32>
    %3 = tpu.matmul %1, %2, %cst {dimension_numbers = #tpu.dot_dimension_numbers<[1], [0], [0], [1], [0, 0, 1, 1], [], []>} : vector<8x32xbf16>, vector<32x32xbf16>, vector<8x32xf32> -> vector<8x32xf32>
    %c0_4 = arith.constant 0 : index
    %c0_5 = arith.constant 0 : index
    %4 = vector.load %arg3[%c0_4, %c0_5] : memref<1x32xf32, #tpu.memory_space<vmem>>, vector<1x32xf32>
    %5 = vector.broadcast %4 : vector<1x32xf32> to vector<8x32xf32>
    %6 = arith.addf %3, %5 : vector<8x32xf32>
    %cst_6 = arith.constant 0.000000e+00 : f32
    %7 = vector.broadcast %cst_6 : f32 to vector<8x32xf32>
    %8 = arith.maximumf %6, %7 : vector<8x32xf32>
    %9 = arith.truncf %8 : vector<8x32xf32> to vector<8x32xbf16>
    %c0_7 = arith.constant 0 : index
    %c0_8 = arith.constant 0 : index
    %10 = vector.load %arg4[%c0_7, %c0_8] : memref<32x128xbf16, #tpu.memory_space<vmem>>, vector<32x128xbf16>
    %cst_9 = arith.constant dense<0.000000e+00> : vector<8x128xf32>
    %11 = tpu.matmul %9, %10, %cst_9 {dimension_numbers = #tpu.dot_dimension_numbers<[1], [0], [0], [1], [0, 0, 1, 1], [], []>} : vector<8x32xbf16>, vector<32x128xbf16>, vector<8x128xf32> -> vector<8x128xf32>
    %c0_10 = arith.constant 0 : index
    %c0_11 = arith.constant 0 : index
    %12 = vector.load %arg5[%c0_10, %c0_11] : memref<1x128xf32, #tpu.memory_space<vmem>>, vector<1x128xf32>
    %13 = vector.broadcast %12 : vector<1x128xf32> to vector<8x128xf32>
    %14 = arith.addf %11, %13 : vector<8x128xf32>
    %cst_12 = arith.constant dense<0xFF800000> : vector<128xf32>
    %15 = vector.multi_reduction <maximumf>, %14, %cst_12 [0] : vector<8x128xf32> to vector<128xf32>
    %16 = vector.shape_cast %15 : vector<128xf32> to vector<1x128xf32>
    %17 = vector.broadcast %16 : vector<1x128xf32> to vector<8x128xf32>
    %18 = arith.subf %14, %17 : vector<8x128xf32>
    %19 = math.exp %18 : vector<8x128xf32>
    %cst_13 = arith.constant dense<0.000000e+00> : vector<128xf32>
    %20 = vector.multi_reduction <add>, %19, %cst_13 [0] : vector<8x128xf32> to vector<128xf32>
    %21 = vector.shape_cast %20 : vector<128xf32> to vector<1x128xf32>
    %22 = math.log %21 : vector<1x128xf32>
    %23 = vector.broadcast %22 : vector<1x128xf32> to vector<8x128xf32>
    %24 = arith.subf %18, %23 : vector<8x128xf32>
    %c0_14 = arith.constant 0 : index
    %c0_15 = arith.constant 0 : index
    %c0_16 = arith.constant 0 : index
    %25 = vector.load %arg6[%c0_14, %c0_15, %c0_16] : memref<1x8x128xf32, #tpu.memory_space<vmem>>, vector<1x8x128xf32>
    %26 = vector.shape_cast %25 : vector<1x8x128xf32> to vector<8x128xf32>
    %27 = vector.shape_cast %24 : vector<8x128xf32> to vector<1x8x128xf32>
    tpu.vector_store %arg6[%c0_14, %c0_15, %c0_16], %27 {strides = array<i32>} : memref<1x8x128xf32, #tpu.memory_space<vmem>>, vector<1x8x128xf32>,
    return
  }
  func.func @transform_0(%arg0: i32) -> (i32, i32, i32) {
    %c0_i32 = arith.constant 0 : i32
    %c0_i32_0 = arith.constant 0 : i32
    %c0_i32_1 = arith.constant 0 : i32
    return %arg0, %c0_i32, %c0_i32_0 : i32, i32, i32
  }
  func.func @transform_1(%arg0: i32) -> (i32, i32) {
    %c0_i32 = arith.constant 0 : i32
    %c0_i32_0 = arith.constant 0 : i32
    %c0_i32_1 = arith.constant 0 : i32
    return %c0_i32, %c0_i32_0 : i32, i32
  }
  func.func @transform_2(%arg0: i32) -> (i32, i32) {
    %c0_i32 = arith.constant 0 : i32
    %c0_i32_0 = arith.constant 0 : i32
    %c0_i32_1 = arith.constant 0 : i32
    return %c0_i32, %c0_i32_0 : i32, i32
  }
  func.func @transform_3(%arg0: i32) -> (i32, i32) {
    %c0_i32 = arith.constant 0 : i32
    %c0_i32_0 = arith.constant 0 : i32
    %c0_i32_1 = arith.constant 0 : i32
    return %c0_i32, %c0_i32_0 : i32, i32
  }
  func.func @transform_4(%arg0: i32) -> (i32, i32) {
    %c0_i32 = arith.constant 0 : i32
    %c0_i32_0 = arith.constant 0 : i32
    %c0_i32_1 = arith.constant 0 : i32
    return %c0_i32, %c0_i32_0 : i32, i32
  }
  func.func @transform_5(%arg0: i32) -> (i32, i32, i32) {
    %c0_i32 = arith.constant 0 : i32
    %c0_i32_0 = arith.constant 0 : i32
    %c0_i32_1 = arith.constant 0 : i32
    return %arg0, %c0_i32, %c0_i32_0 : i32, i32, i32
  }
}

</mosaic_0001>

<llo_original>
// kernel: tpu_custom_call.1
$region0: #{tpu_custom_call.1}
  #allocation0 [shape = 'u32[]', space=smem, size = 0x4, offset = 0x4, fixed_abs, tag = 'smem constant byte address 0x4 - core index']
  #allocation1 [shape = 'u32[144,128]{1,0:T(1,128)}', space=vmem, size = 0x12000, scoped, tag = 'internal scratch']
  %s0 = inlined_call_operand.hbm [shape: bf16[8,8,32], index: 0, kind: input, shape index: {}]
  %s1 = inlined_call_operand.hbm [shape: bf16[32,32], index: 1, kind: input, shape index: {}]
  %s2 = inlined_call_operand.vmem [shape: f32[1,32], index: 2, kind: input, shape index: {}]
  %s3 = inlined_call_operand.hbm [shape: bf16[32,128], index: 3, kind: input, shape index: {}]
  %s4 = inlined_call_operand.vmem [shape: f32[1,128], index: 4, kind: input, shape index: {}]
  %s5 = inlined_call_operand.hbm [shape: f32[8,8,128], index: 5, kind: output, shape index: {}]
  %s6 = sld [smem:[#allocation0]]
  $region65: #{tpu_custom_call.1} parent=0
    _
  %s8 = ssub.s32 1, %s6
  %s9 = scalar_select 0, %s8, %s6
  $region1: #{tpu_custom_call.1} parent=0
    #allocation2 [shape = 'u8[4096]{0}', space=vmem, size = 0x1000, scoped, tag = 'input window, operand 0']
    #allocation3 [shape = 's32[2]{0}', space=sflag, size = 0x8, scoped, tag = 'scoped memory for tpu_custom_call.1']
    #allocation4 [shape = 's32[2]{0}', space=sflag, size = 0x8, scoped, tag = 'scoped memory for tpu_custom_call.1']
    #allocation5 [shape = 'u8[8192]{0}', space=vmem, size = 0x2000, scoped, tag = 'input window, operand 1, single buffered']
    #allocation6 [shape = 's32[1]{0}', space=sflag, size = 0x4, scoped, tag = 'scoped memory for tpu_custom_call.1']
    #allocation7 [shape = 'u8[8192]{0}', space=vmem, size = 0x2000, scoped, tag = 'input window, operand 3, single buffered']
    #allocation8 [shape = 'u8[8192]{0}', space=vmem, size = 0x2000, scoped, tag = 'output window, operand 0']
    %10 = vsyncpa [#allocation3], 0
    %s11 = scalar_lea.sflag [#allocation3], 1
    %12 = vsyncpa %s11, 0
    %13 = vsyncpa [#allocation6], 0
    %14 = vsyncpa [#allocation4], 0
    %s15 = scalar_lea.sflag [#allocation4], 1
    %16 = vsyncpa %s15, 0
    loop: start=0, step=1, limit=10
    $region2: #{tpu_custom_call.1} parent=1 // loop_pre_header
      _
    $region3: #{tpu_custom_call.1} parent=1 // loop_header
      %s18 = sphi 0, %s22
      %p19 = scmp.ge.s32.totalorder %s18, 10
      %s28 = sphi 0, %s30
      %s31 = sphi 0, %s28
      %s32 = sphi 0, %s31
      %s48 = sphi 0, %s32
      %s52 = sphi 0, %s52
      %s54 = sphi 0, %s52
      %s55 = sphi 0, %s54
      %s69 = sphi 0, %s55
      %s73 = sphi 0, %s73
      %s75 = sphi 0, %s73
      %s76 = sphi 0, %s75
      %s90 = sphi 0, %s76
      %s94 = sphi 0, %s94
      %s96 = sphi 0, %s94
      %s97 = sphi 0, %s96
      %s111 = sphi 0, %s97
      %s115 = sphi 0, %s115
      %s117 = sphi 0, %s115
      %s118 = sphi 0, %s117
      %s132 = sphi 0, %s118
      %s138 = sphi 0, %s140
      %s141 = sphi 0, %s138
      %s142 = sphi 0, %s141
      %s158 = sphi 0, %s142
    $region4: #{tpu_custom_call.1} parent=1 // loop_header_branch
      %21 = sbr.rel (%p19) target = $region8
    $region5: #{tpu_custom_call.1} parent=1 // loop_body
      %s23 = ssub.s32 %s18, 1
      %s24 = ssub.s32 %s18, 2
      %s25 = sadd.s32 %s18, 1
      %s26 = ssub.s32 %s18, %s25
      %p27 = scmp.eq.s32.totalorder %s26, 0
      %s29 = sadd.s32 %s28, 1
      %s30 = scalar_select %p27, %s28, %s29
      %p33 = pneg %p27
      %p34 = scmp.eq.s32.totalorder %s18, 7
      %p35 = por %p33, %p34
      %p36 = scmp.ne.s32.totalorder %s28, %s31
      %p37 = scmp.eq.s32.totalorder %s18, 0
      %p38 = por %p36, %p37
      %p39 = scmp.ne.s32.totalorder %s28, %s31
      %p40 = scmp.eq.s32.totalorder %s23, 7
      %p41 = por %p39, %p40
      %p42 = scmp.ne.s32.totalorder %s31, %s32
      %p43 = scmp.eq.s32.totalorder %s23, 0
      %p44 = por %p42, %p43
      %p45 = scmp.ne.s32.totalorder %s31, %s32
      %p46 = scmp.eq.s32.totalorder %s24, 7
      %p47 = por %p45, %p46
      %p49 = scmp.ne.s32.totalorder %s32, %s48
      %p50 = scmp.eq.s32.totalorder %s24, 0
      %p51 = por %p49, %p50
      %s53 = sadd.s32 %s52, 1
      %p56 = scmp.eq.s32.totalorder %s18, 7
      %p57 = scmp.ne.s32.totalorder %s52, %s54
      %p58 = scmp.eq.s32.totalorder %s18, 0
      %p59 = por %p57, %p58
      %p60 = scmp.ne.s32.totalorder %s52, %s54
      %p61 = scmp.eq.s32.totalorder %s23, 7
      %p62 = por %p60, %p61
      %p63 = scmp.ne.s32.totalorder %s54, %s55
      %p64 = scmp.eq.s32.totalorder %s23, 0
      %p65 = por %p63, %p64
      %p66 = scmp.ne.s32.totalorder %s54, %s55
      %p67 = scmp.eq.s32.totalorder %s24, 7
      %p68 = por %p66, %p67
      %p70 = scmp.ne.s32.totalorder %s55, %s69
      %p71 = scmp.eq.s32.totalorder %s24, 0
      %p72 = por %p70, %p71
      %s74 = sadd.s32 %s73, 1
      %p77 = scmp.eq.s32.totalorder %s18, 7
      %p78 = scmp.ne.s32.totalorder %s73, %s75
      %p79 = scmp.eq.s32.totalorder %s18, 0
      %p80 = por %p78, %p79
      %p81 = scmp.ne.s32.totalorder %s73, %s75
      %p82 = scmp.eq.s32.totalorder %s23, 7
      %p83 = por %p81, %p82
      %p84 = scmp.ne.s32.totalorder %s75, %s76
      %p85 = scmp.eq.s32.totalorder %s23, 0
      %p86 = por %p84, %p85
      %p87 = scmp.ne.s32.totalorder %s75, %s76
      %p88 = scmp.eq.s32.totalorder %s24, 7
      %p89 = por %p87, %p88
      %p91 = scmp.ne.s32.totalorder %s76, %s90
      %p92 = scmp.eq.s32.totalorder %s24, 0
      %p93 = por %p91, %p92
      %s95 = sadd.s32 %s94, 1
      %p98 = scmp.eq.s32.totalorder %s18, 7
      %p99 = scmp.ne.s32.totalorder %s94, %s96
      %p100 = scmp.eq.s32.totalorder %s18, 0
      %p101 = por %p99, %p100
      %p102 = scmp.ne.s32.totalorder %s94, %s96
      %p103 = scmp.eq.s32.totalorder %s23, 7
      %p104 = por %p102, %p103
      %p105 = scmp.ne.s32.totalorder %s96, %s97
      %p106 = scmp.eq.s32.totalorder %s23, 0
      %p107 = por %p105, %p106
      %p108 = scmp.ne.s32.totalorder %s96, %s97
      %p109 = scmp.eq.s32.totalorder %s24, 7
      %p110 = por %p108, %p109
      %p112 = scmp.ne.s32.totalorder %s97, %s111
      %p113 = scmp.eq.s32.totalorder %s24, 0
      %p114 = por %p112, %p113
      %s116 = sadd.s32 %s115, 1
      %p119 = scmp.eq.s32.totalorder %s18, 7
      %p120 = scmp.ne.s32.totalorder %s115, %s117
      %p121 = scmp.eq.s32.totalorder %s18, 0
      %p122 = por %p120, %p121
      %p123 = scmp.ne.s32.totalorder %s115, %s117
      %p124 = scmp.eq.s32.totalorder %s23, 7
      %p125 = por %p123, %p124
      %p126 = scmp.ne.s32.totalorder %s117, %s118
      %p127 = scmp.eq.s32.totalorder %s23, 0
      %p128 = por %p126, %p127
      %p129 = scmp.ne.s32.totalorder %s117, %s118
      %p130 = scmp.eq.s32.totalorder %s24, 7
      %p131 = por %p129, %p130
      %p133 = scmp.ne.s32.totalorder %s118, %s132
      %p134 = scmp.eq.s32.totalorder %s24, 0
      %p135 = por %p133, %p134
      %s136 = ssub.s32 %s18, %s25
      %p137 = scmp.eq.s32.totalorder %s136, 0
      %s139 = sadd.s32 %s138, 1
      %s140 = scalar_select %p137, %s138, %s139
      %p143 = pneg %p137
      %p144 = scmp.eq.s32.totalorder %s18, 7
      %p145 = por %p143, %p144
      %p146 = scmp.ne.s32.totalorder %s138, %s141
      %p147 = scmp.eq.s32.totalorder %s18, 0
      %p148 = por %p146, %p147
      %p149 = scmp.ne.s32.totalorder %s138, %s141
      %p150 = scmp.eq.s32.totalorder %s23, 7
      %p151 = por %p149, %p150
      %p152 = scmp.ne.s32.totalorder %s141, %s142
      %p153 = scmp.eq.s32.totalorder %s23, 0
      %p154 = por %p152, %p153
      %p155 = scmp.ne.s32.totalorder %s141, %s142
      %p156 = scmp.eq.s32.totalorder %s24, 7
      %p157 = por %p155, %p156
      %p159 = scmp.ne.s32.totalorder %s142, %s158
      %p160 = scmp.eq.s32.totalorder %s24, 0
      %p161 = por %p159, %p160
      %p162 = scmp.le.s32.totalorder 1, %s18
      %p163 = scmp.lt.s32.totalorder %s18, 9
      %p164 = pnand %p162, %p163
      %p165 = pneg %p164
      // Predicated region
      $region9: #{tpu_custom_call.1} parent=5 // pred_check
        _
      $region10: #{tpu_custom_call.1} parent=5 // pred_check_branch
        %167 = sbr.rel (%p164) target = $region12
      $region11: #{tpu_custom_call.1} parent=5 // pred_region
        %s168 = ssub.s32 %s18, 1
        // Predicated region
        $region13: #{tpu_custom_call.1} parent=11 // pred_check
          %p169 = pneg %p65
        $region14: #{tpu_custom_call.1} parent=11 // pred_check_branch
          %171 = sbr.rel (%p169) target = $region16
        $region15: #{tpu_custom_call.1} parent=11 // pred_region
          %s173 = ssub.s32 256, 256
          %174 = vsyncadd [#allocation6], %s173
          %s175 = sshll.u32 [#allocation5], 4
          %s176 = int_to_ptr.vmem [resolvable:$true] %s175
          %181 = dma.hbm_to_vmem [thread:$0]  %s1, 256, %s176, [#allocation6], 64, 64, 4
        $region16: #{tpu_custom_call.1} parent=11 // pred_fallthru
          _
        // Predicated region
        $region17: #{tpu_custom_call.1} parent=11 // pred_check
          %p182 = pneg %p86
        $region18: #{tpu_custom_call.1} parent=11 // pred_check_branch
          %184 = sbr.rel (%p182) target = $region20
        $region19: #{tpu_custom_call.1} parent=11 // pred_region
          _
        $region20: #{tpu_custom_call.1} parent=11 // pred_fallthru
          _
        // Predicated region
        $region21: #{tpu_custom_call.1} parent=11 // pred_check
          %p185 = pneg %p107
        $region22: #{tpu_custom_call.1} parent=11 // pred_check_branch
          %187 = sbr.rel (%p185) target = $region24
        $region23: #{tpu_custom_call.1} parent=11 // pred_region
          %s189 = ssub.s32 256, 256
          %190 = vsyncadd [#allocation6], %s189
          %s191 = sshll.u32 [#allocation7], 4
          %s192 = int_to_ptr.vmem [resolvable:$true] %s191
          %197 = dma.hbm_to_vmem [thread:$0]  %s3, 256, %s192, [#allocation6], 64, 64, 4
        $region24: #{tpu_custom_call.1} parent=11 // pred_fallthru
          _
        // Predicated region
        $region25: #{tpu_custom_call.1} parent=11 // pred_check
          %p198 = pneg %p128
        $region26: #{tpu_custom_call.1} parent=11 // pred_check_branch
          %200 = sbr.rel (%p198) target = $region28
        $region27: #{tpu_custom_call.1} parent=11 // pred_region
          _
        $region28: #{tpu_custom_call.1} parent=11 // pred_fallthru
          _
      $region12: #{tpu_custom_call.1} parent=5 // pred_fallthru
        _
      %p201 = scmp.lt.s32.totalorder %s18, 8
      // Predicated region
      $region29: #{tpu_custom_call.1} parent=5 // pred_check
        %p202 = pneg %p201
      $region30: #{tpu_custom_call.1} parent=5 // pred_check_branch
        %204 = sbr.rel (%p202) target = $region32
      $region31: #{tpu_custom_call.1} parent=5 // pred_region
        // Predicated region
        $region33: #{tpu_custom_call.1} parent=31 // pred_check
          %p205 = pneg %p38
        $region34: #{tpu_custom_call.1} parent=31 // pred_check_branch
          %207 = sbr.rel (%p205) target = $region36
        $region35: #{tpu_custom_call.1} parent=31 // pred_region
          %s208 = sand.u32 %s28, 1
          %s209 = scalar_lea.sflag [#allocation3], %s208
          %s210 = sand.u32 %s28, 1
          %s211 = smul.addr %s210, 4
          %s212 = scalar_lea.vmem [#allocation2], %s211
          %s214 = ssub.s32 64, 64
          %215 = vsyncadd %s209, %s214
          %s216 = smul.addr %s18, 64
          %s217 = scalar_lea.hbm %s0, %s216
          %s219 = sshll.u32 %s212, 4
          %s220 = int_to_ptr.vmem [resolvable:$true] %s219
          %222 = dma.hbm_to_vmem [thread:$0]  %s217, 64, %s220, %s209
        $region36: #{tpu_custom_call.1} parent=31 // pred_fallthru
          _
      $region32: #{tpu_custom_call.1} parent=5 // pred_fallthru
        _
      %p223 = scmp.le.s32.totalorder 1, %s18
      %p224 = scmp.lt.s32.totalorder %s18, 9
      %p225 = pnand %p223, %p224
      %p226 = pneg %p225
      // Predicated region
      $region37: #{tpu_custom_call.1} parent=5 // pred_check
        _
      $region38: #{tpu_custom_call.1} parent=5 // pred_check_branch
        %228 = sbr.rel (%p225) target = $region40
      $region39: #{tpu_custom_call.1} parent=5 // pred_region
        %s229 = ssub.s32 %s18, 1
        %s230 = sand.u32 %s31, 1
        %s231 = scalar_lea.sflag [#allocation3], %s230
        %s232 = sand.u32 %s31, 1
        %s233 = smul.addr %s232, 4
        %s234 = scalar_lea.vmem [#allocation2], %s233
        // Predicated region
        $region41: #{tpu_custom_call.1} parent=39 // pred_check
          %p235 = pneg %p44
        $region42: #{tpu_custom_call.1} parent=39 // pred_check_branch
          %237 = sbr.rel (%p235) target = $region44
        $region43: #{tpu_custom_call.1} parent=39 // pred_region
          %238 = dma.done %s231, 64
        $region44: #{tpu_custom_call.1} parent=39 // pred_fallthru
          _
        // Predicated region
        $region45: #{tpu_custom_call.1} parent=39 // pred_check
          %p239 = pneg %p65
        $region46: #{tpu_custom_call.1} parent=39 // pred_check_branch
          %241 = sbr.rel (%p239) target = $region48
        $region47: #{tpu_custom_call.1} parent=39 // pred_region
          %242 = dma.done [#allocation6], 256
        $region48: #{tpu_custom_call.1} parent=39 // pred_fallthru
          _
        // Predicated region
        $region49: #{tpu_custom_call.1} parent=39 // pred_check
          %p243 = pneg %p107
        $region50: #{tpu_custom_call.1} parent=39 // pred_check_branch
          %245 = sbr.rel (%p243) target = $region52
        $region51: #{tpu_custom_call.1} parent=39 // pred_region
          %246 = dma.done [#allocation6], 256
        $region52: #{tpu_custom_call.1} parent=39 // pred_fallthru
          _
        %s247 = sand.u32 %s31, 1
        %s248 = scalar_lea.sflag [#allocation3], %s247
        %s249 = sand.u32 %s31, 1
        %s250 = smul.addr %s249, 4
        %s251 = scalar_lea.vmem [#allocation2], %s250
        %p252 = pneg %p44
        %p253 = pneg %p41
        %p254 = pneg %p65
        %p255 = pneg %p62
        %p256 = pneg %p86
        %p257 = pneg %p83
        %p258 = pneg %p107
        %p259 = pneg %p104
        %p260 = pneg %p128
        %p261 = pneg %p125
        %p262 = pneg %p154
        %p263 = pneg %p151
        %s264 = sand.u32 %s141, 1
        %s265 = scalar_lea.sflag [#allocation4], %s264
        %s266 = sand.u32 %s141, 1
        %s267 = smul.addr %s266, 8
        %s268 = scalar_lea.vmem [#allocation8], %s267
        %v270 = vld [vmem:[%s234] sm:$0xf]
        %v271 = vld [vmem:[#allocation5] sm:$0xf]
        %v272 = vld [vmem:[#allocation5 + $0x4] sm:$0xf]
        %v273 = vld [vmem:[#allocation5 + $0x8] sm:$0xf]
        %v274 = vld [vmem:[#allocation5 + $0xc] sm:$0xf]
        %v275 = vld [vmem:[%s2] sm:$0x1]
        %v277 = vlaneseq
        %v278 = vshrl.u32 %v277, 7
        %v279 = vsub.s32 0, %v278
        %v280 = vrot.slane %v275, %v279
        %v286 = vunpack.c.l.b16 %v271
        %v287 = vunpack.c.l.b16 %v272
        %v288 = vunpack.c.l.b16 %v273
        %v289 = vunpack.c.l.b16 %v274
        %v290 = vpack.c.b16 %v287, %v286
        %v291 = vpack.c.b16 %v289, %v288
        %vm294 = vcmask 261120
        %v296 = vsel %vm294, %v270, 0
        %298 = vmatprep.subr.bf16.mxu0 0
        %299 = vmatpush1.bf16.msra.mxu0 %v290
        %300 = vmatprep.subr.bf16.mxu0 0
        %301 = vmatpush1.bf16.msra.mxu0 %v291
        %302 = vmatprep.subr.bf16.mxu0 0
        %303 = vmatpush1.bf16.msra.mxu0 0
        %304 = vmatprep.subr.bf16.mxu0 0
        %305 = vmatpush1.bf16.msra.mxu0 0
        %306 = vmatprep.subr.bf16.mxu0 0
        %307 = vmatpush1.bf16.msra.mxu0 0
        %308 = vmatprep.subr.bf16.mxu0 0
        %309 = vmatpush1.bf16.msra.mxu0 0
        %310 = vmatprep.subr.bf16.mxu0 0
        %311 = vmatpush1.bf16.msra.mxu0 0
        %312 = vmatprep.subr.bf16.mxu0 0
        %313 = vmatpush1.bf16.msra.mxu0 0
        %314 = vmatprep.subr.bf16.mxu0 0
        %315 = vmatpush1.bf16.msra.mxu0 0
        %316 = vmatprep.subr.bf16.mxu0 0
        %317 = vmatpush1.bf16.msra.mxu0 0
        %318 = vmatprep.subr.bf16.mxu0 0
        %319 = vmatpush1.bf16.msra.mxu0 0
        %320 = vmatprep.subr.bf16.mxu0 0
        %321 = vmatpush1.bf16.msra.mxu0 0
        %322 = vmatprep.subr.bf16.mxu0 0
        %323 = vmatpush1.bf16.msra.mxu0 0
        %324 = vmatprep.subr.bf16.mxu0 0
        %325 = vmatpush1.bf16.msra.mxu0 0
        %326 = vmatprep.subr.bf16.mxu0 0
        %327 = vmatpush1.bf16.msra.mxu0 0
        %328 = vmatprep.subr.bf16.mxu0 0
        %329 = vmatpush1.bf16.msra.mxu0 0
        %330 = vmatprep.mubr.bf16.mxu0 0
        %331 = vmatmul.mubr.bf16.gmra.mrb[0].mxu0 %v296
        %v332 = vpop.f32.mrb[0].mxu0
        %v333 = vadd.f32 %v280, %v332
        %v334 = vpop.f32.mrb[0].mxu0
        %v335 = vpop.f32.mrb[0].mxu0
        %v336 = vpop.f32.mrb[0].mxu0
        %337 = vdwg.mxu0
        %v338 = vmax.f32 %v333, 0.0
        %v339 = vpack.c.bf16 %v338, %v338
        %v340 = vld [vmem:[#allocation7] sm:$0xf]
        %v341 = vld [vmem:[#allocation7 + $0x4] sm:$0xf]
        %v342 = vld [vmem:[#allocation7 + $0x8] sm:$0xf]
        %v343 = vld [vmem:[#allocation7 + $0xc] sm:$0xf]
        %v344 = vld [vmem:[%s4] sm:$0x1]
        %v346 = vlaneseq
        %v347 = vshrl.u32 %v346, 7
        %v348 = vsub.s32 0, %v347
        %v349 = vrot.slane %v344, %v348
        %v355 = vunpack.c.l.b16 %v340
        %v356 = vunpack.c.l.b16 %v341
        %v357 = vunpack.c.l.b16 %v342
        %v358 = vunpack.c.l.b16 %v343
        %v359 = vpack.c.b16 %v356, %v355
        %v360 = vpack.c.b16 %v358, %v357
        %v364 = vsel %vm294, %v339, 0
        %366 = vmatprep.subr.bf16.mxu0 0
        %367 = vmatpush1.bf16.msra.mxu0 %v359
        %368 = vmatprep.subr.bf16.mxu0 0
        %369 = vmatpush1.bf16.msra.mxu0 %v360
        %370 = vmatprep.subr.bf16.mxu0 0
        %371 = vmatpush1.bf16.msra.mxu0 0
        %372 = vmatprep.subr.bf16.mxu0 0
        %373 = vmatpush1.bf16.msra.mxu0 0
        %374 = vmatprep.subr.bf16.mxu0 0
        %375 = vmatpush1.bf16.msra.mxu0 0
        %376 = vmatprep.subr.bf16.mxu0 0
        %377 = vmatpush1.bf16.msra.mxu0 0
        %378 = vmatprep.subr.bf16.mxu0 0
        %379 = vmatpush1.bf16.msra.mxu0 0
        %380 = vmatprep.subr.bf16.mxu0 0
        %381 = vmatpush1.bf16.msra.mxu0 0
        %382 = vmatprep.subr.bf16.mxu0 0
        %383 = vmatpush1.bf16.msra.mxu0 0
        %384 = vmatprep.subr.bf16.mxu0 0
        %385 = vmatpush1.bf16.msra.mxu0 0
        %386 = vmatprep.subr.bf16.mxu0 0
        %387 = vmatpush1.bf16.msra.mxu0 0
        %388 = vmatprep.subr.bf16.mxu0 0
        %389 = vmatpush1.bf16.msra.mxu0 0
        %390 = vmatprep.subr.bf16.mxu0 0
        %391 = vmatpush1.bf16.msra.mxu0 0
        %392 = vmatprep.subr.bf16.mxu0 0
        %393 = vmatpush1.bf16.msra.mxu0 0
        %394 = vmatprep.subr.bf16.mxu0 0
        %395 = vmatpush1.bf16.msra.mxu0 0
        %396 = vmatprep.subr.bf16.mxu0 0
        %397 = vmatpush1.bf16.msra.mxu0 0
        %398 = vmatprep.mubr.bf16.mxu0 0
        %399 = vmatmul.mubr.bf16.gmra.mrb[0].mxu0 %v364
        %v400 = vpop.f32.mrb[0].mxu0
        %v401 = vadd.f32 %v349, %v400
        %v402 = vpop.f32.mrb[0].mxu0
        %v403 = vpop.f32.mrb[0].mxu0
        %v404 = vpop.f32.mrb[0].mxu0
        %405 = vdwg.mxu0
        %v406 = vrot.slane %v401, 4
        %v407 = vmax.f32 %v401, %v406
        %v408 = vrot.slane %v407, 2
        %v409 = vmax.f32 %v407, %v408
        %v410 = vrot.slane %v409, 1
        %v411 = vmax.f32 %v409, %v410
        %v412 = vsub.f32 %v401, %v411
        %v413 = vmul.f32 %v412, 1.442695
        %v414 = vpow.pop %v413
        %v415 = vrot.slane %v414, 4
        %v416 = vadd.f32 %v414, %v415
        %v417 = vrot.slane %v416, 2
        %v418 = vadd.f32 %v416, %v417
        %v419 = vrot.slane %v418, 1
        %v420 = vadd.f32 %v418, %v419
        %v421 = vlog2.pop %v420
        %v422 = vmul.f32 %v421, 0.6931472
        %v423 = vsub.f32 %v412, %v422
        %424 = vst [vmem:[%s268] sm:$0xff] %v423
        %s425 = sand.u32 %s141, 1
        %s426 = scalar_lea.sflag [#allocation4], %s425
        %s427 = sand.u32 %s141, 1
        %s428 = smul.addr %s427, 8
        %s429 = scalar_lea.vmem [#allocation8], %s428
        // Predicated region
        $region53: #{tpu_custom_call.1} parent=39 // pred_check
          %p430 = pneg %p151
        $region54: #{tpu_custom_call.1} parent=39 // pred_check_branch
          %432 = sbr.rel (%p430) target = $region56
        $region55: #{tpu_custom_call.1} parent=39 // pred_region
          %s434 = ssub.s32 128, 128
          %435 = vsyncadd %s426, %s434
          %s436 = smul.addr %s23, 128
          %s437 = scalar_lea.hbm %s5, %s436
          %s439 = sshll.u32 %s429, 4
          %s440 = int_to_ptr.vmem [resolvable:$true] %s439
          %442 = dma.vmem_to_hbm [thread:$0]  %s440, 128, %s437, %s426
        $region56: #{tpu_custom_call.1} parent=39 // pred_fallthru
          _
      $region40: #{tpu_custom_call.1} parent=5 // pred_fallthru
        _
      %p443 = scmp.le.s32.totalorder 2, %s18
      // Predicated region
      $region57: #{tpu_custom_call.1} parent=5 // pred_check
        %p444 = pneg %p443
      $region58: #{tpu_custom_call.1} parent=5 // pred_check_branch
        %446 = sbr.rel (%p444) target = $region60
      $region59: #{tpu_custom_call.1} parent=5 // pred_region
        %s447 = ssub.s32 %s18, 2
        // Predicated region
        $region61: #{tpu_custom_call.1} parent=59 // pred_check
          %p448 = pneg %p157
        $region62: #{tpu_custom_call.1} parent=59 // pred_check_branch
          %450 = sbr.rel (%p448) target = $region64
        $region63: #{tpu_custom_call.1} parent=59 // pred_region
          %s451 = sand.u32 %s142, 1
          %s452 = scalar_lea.sflag [#allocation4], %s451
          %s453 = sand.u32 %s142, 1
          %s454 = smul.addr %s453, 8
          %s455 = scalar_lea.vmem [#allocation8], %s454
          %456 = dma.done %s452, 128
        $region64: #{tpu_custom_call.1} parent=59 // pred_fallthru
          _
      $region60: #{tpu_custom_call.1} parent=5 // pred_fallthru
        _
    $region6: #{tpu_custom_call.1} parent=1 // loop_footer
      %s22 = sadd.s32 1, %s18
    $region7: #{tpu_custom_call.1} parent=1 // loop_footer_branch
      %17 = sbr.rel target = $region3
    $region8: #{tpu_custom_call.1} parent=1 // loop_exit
      _
    %457 = vsyncpa [#allocation3], 1
    %s458 = scalar_lea.sflag [#allocation3], 1
    %459 = vsyncpa %s458, 1
    %460 = vsyncpa [#allocation6], 1
    %461 = vsyncpa [#allocation4], 1
    %s462 = scalar_lea.sflag [#allocation4], 1
    %463 = vsyncpa %s462, 1

</llo_original>
